<compile_context>
chip_gen: v5e
topology: v5e:2x2
jax: 0.10.0
libtpu: 0.0.40
codegen_flags: <defaults>
</compile_context>

<pallas_src>
import jax
import jax.numpy as jnp
from jax.experimental import pallas as pl
from jax.experimental.pallas import tpu as pltpu


TB_MAX = 32768  # lane-axis batch tile (multiple of 128); ~10 MiB peak VMEM at f32


def mlp_kernel(x_ref,
               w1_ref, b1_ref,
               w2_ref, b2_ref,
               w3_ref, b3_ref,
               w4_ref, b4_ref,
               o_ref):
    f32 = jnp.float32
    x = x_ref[...]                                                    # (3, TB)

    # Layer 1+2 sigmoids are pre-folded: tanh(W·x + b) == sigmoid of the
    # original affine, with the 0.5*(.)+0.5 pushed into the next layer's W,b.
    t = jnp.tanh(jnp.dot(w1_ref[...], x, preferred_element_type=f32)
                 + b1_ref[...])                                       # (12, TB)
    t = jnp.tanh(jnp.dot(w2_ref[...], t, preferred_element_type=f32)
                 + b2_ref[...])                                       # (9, TB)

    # Linear3 (folded) + ReLU
    h = jnp.maximum(jnp.dot(w3_ref[...], t, preferred_element_type=f32)
                    + b3_ref[...], 0.0)                               # (6, TB)

    # Linear4
    h = jnp.dot(w4_ref[...], h, preferred_element_type=f32) + b4_ref[...]

    o_ref[...] = h.astype(o_ref.dtype)                                # (1, TB) lane-dense


def fold_params(params):
    """One-time constant folding of the sigmoid affine (0.5*tanh(0.5*z)+0.5).

    Input params are PyTorch-layout (W: (out, in), b: (out, 1)).
      t1 = tanh(0.5*W1 x + 0.5*b1)            == 2*sigmoid1 - 1
      t2 = tanh(0.25*W2 t1 + 0.25*Σ_row W2 + 0.5*b2)
      z3 = 0.5*W3 t2 + 0.5*Σ_row W3 + b3 ; h3 = relu(z3)
      y  = W4 h3 + b4
    is bit-equivalent (up to ULP) to the original sigmoid/sigmoid/relu network.
    """
    (w1, b1), (w2, b2), (w3, b3), (w4, b4) = params
    w1f = 0.5 * w1
    b1f = 0.5 * b1
    w2f = 0.25 * w2
    b2f = 0.5 * b2 + 0.25 * jnp.sum(w2, axis=1, keepdims=True)
    w3f = 0.5 * w3
    b3f = b3 + 0.5 * jnp.sum(w3, axis=1, keepdims=True)
    return (w1f, b1f), (w2f, b2f), (w3f, b3f), (w4, b4)


def _pick_tile(b_pad128):
    tb = min(TB_MAX, b_pad128)
    if tb == b_pad128 and b_pad128 >= 256:
        # Split into >= 2 grid steps so both v7x TensorCores get work.
        tb = -(-(b_pad128 // 2) // 128) * 128
    return tb


@jax.jit
def mlp_forward(x, folded_params):
    (w1, b1), (w2, b2), (w3, b3), (w4, b4) = folded_params
    B = x.shape[0]

    # Batch-on-lanes: (B, 3) -> (3, B_pad), zero-padded so the grid tiles exactly.
    b_pad128 = max(128, -(-B // 128) * 128)
    tb = _pick_tile(b_pad128)
    b_pad = -(-b_pad128 // tb) * tb
    xt = jnp.zeros((3, b_pad), x.dtype).at[:, :B].set(x.T)

    grid = (b_pad // tb,)

    # Weights/biases: full-array blocks, constant index_map -> VMEM-resident.
    const = lambda a: pl.BlockSpec(a.shape, lambda i: (0, 0))

    out = pl.pallas_call(
        mlp_kernel,
        out_shape=jax.ShapeDtypeStruct((1, b_pad), jnp.float32),
        grid=grid,
        in_specs=[pl.BlockSpec((3, tb), lambda i: (0, i)),
                  const(w1), const(b1),
                  const(w2), const(b2),
                  const(w3), const(b3),
                  const(w4), const(b4)],
        out_specs=pl.BlockSpec((1, tb), lambda i: (0, i)),
        compiler_params=pltpu.CompilerParams(
            dimension_semantics=("parallel",),
            vmem_limit_bytes=32 * 1024 * 1024,
            # Let XLA fuse the transpose/pad producer of x into the call.
            allow_input_fusion=[True] + [False] * 8),
    )(xt, w1, b1, w2, b2, w3, b3, w4, b4)

    return out[:, :B].T  # (B, 1)


def init_params():
    # Deterministic init mimicking nn.Linear's uniform(-1/sqrt(fan_in), 1/sqrt(fan_in)).
    # Weights kept in PyTorch (out, in) layout; biases as (out, 1) columns.
    key = jax.random.PRNGKey(42)
    dims = [(3, 12), (12, 9), (9, 6), (6, 1)]
    params = []
    for (fan_in, fan_out) in dims:
        key, kw, kb = jax.random.split(key, 3)
        bound = 1.0 / jnp.sqrt(jnp.float32(fan_in))
        w = jax.random.uniform(kw, (fan_out, fan_in), jnp.float32, -bound, bound)
        b = jax.random.uniform(kb, (fan_out, 1), jnp.float32, -bound, bound)
        params.append((w, b))
    return params


def reference_forward(x, params):
    (w1, b1), (w2, b2), (w3, b3), (w4, b4) = params
    h = jax.nn.sigmoid(x @ w1.T + b1.T)
    h = jax.nn.sigmoid(h @ w2.T + b2.T)
    h = jnp.maximum(h @ w3.T + b3.T, 0.0)
    h = h @ w4.T + b4.T
    return h


if __name__ == "__main__":
    params = init_params()
    folded = fold_params(params)   # one-time constant folding
    key = jax.random.PRNGKey(0)
    k1, k2 = jax.random.split(key)

    # Small batch (single 128-wide tile, grid=1).
    B = 8
    x = jax.random.normal(k1, (B, 3), jnp.float32)
    out = jax.block_until_ready(mlp_forward(x, folded))
    ref = reference_forward(x, params)
    assert out.shape == (B, 1), out.shape
    assert jnp.allclose(out, ref, atol=1e-5, rtol=1e-5), (out, ref)

    # Ragged batch that exercises the grid>=2 split + padding path.
    B2 = 384
    x2 = jax.random.normal(k2, (B2, 3), jnp.float32)
    out2 = jax.block_until_ready(mlp_forward(x2, folded))
    ref2 = reference_forward(x2, params)
    assert out2.shape == (B2, 1), out2.shape
    assert jnp.allclose(out2, ref2, atol=1e-5, rtol=1e-5)

    print("KERNEL_OK")
</pallas_src>

<mosaic_0001>
module attributes {stable_mosaic.version = 11 : i64} {
  func.func @mlp_kernel(%arg0: i32, %arg1: memref<3x128xf32, #tpu.memory_space<vmem>>, %arg2: memref<12x3xf32, #tpu.memory_space<vmem>>, %arg3: memref<12x1xf32, #tpu.memory_space<vmem>>, %arg4: memref<9x12xf32, #tpu.memory_space<vmem>>, %arg5: memref<9x1xf32, #tpu.memory_space<vmem>>, %arg6: memref<6x9xf32, #tpu.memory_space<vmem>>, %arg7: memref<6x1xf32, #tpu.memory_space<vmem>>, %arg8: memref<1x6xf32, #tpu.memory_space<vmem>>, %arg9: memref<1x1xf32, #tpu.memory_space<vmem>>, %arg10: memref<1x128xf32, #tpu.memory_space<vmem>>) attributes {dimension_semantics = [#tpu.dimension_semantics<parallel>], iteration_bounds = array<i64: 1>, scalar_prefetch = 0 : i64, scratch_operands = 0 : i64, tpu.core_type = #tpu.core_type<tc>, window_params = [{transform_indices = @transform_0, window_bounds = array<i64: 3, 128>}, {pipeline_mode = #tpu.pipeline_mode<synchronous>, transform_indices = @transform_1, window_bounds = array<i64: 12, 3>}, {pipeline_mode = #tpu.pipeline_mode<synchronous>, transform_indices = @transform_2, window_bounds = array<i64: 12, 1>}, {pipeline_mode = #tpu.pipeline_mode<synchronous>, transform_indices = @transform_3, window_bounds = array<i64: 9, 12>}, {pipeline_mode = #tpu.pipeline_mode<synchronous>, transform_indices = @transform_4, window_bounds = array<i64: 9, 1>}, {pipeline_mode = #tpu.pipeline_mode<synchronous>, transform_indices = @transform_5, window_bounds = array<i64: 6, 9>}, {pipeline_mode = #tpu.pipeline_mode<synchronous>, transform_indices = @transform_6, window_bounds = array<i64: 6, 1>}, {pipeline_mode = #tpu.pipeline_mode<synchronous>, transform_indices = @transform_7, window_bounds = array<i64: 1, 6>}, {pipeline_mode = #tpu.pipeline_mode<synchronous>, transform_indices = @transform_8, window_bounds = array<i64: 1, 1>}, {transform_indices = @transform_9, window_bounds = array<i64: 1, 128>}]} {
    %c0 = arith.constant 0 : index
    %c0_0 = arith.constant 0 : index
    %0 = vector.load %arg1[%c0, %c0_0] : memref<3x128xf32, #tpu.memory_space<vmem>>, vector<3x128xf32>
    %c0_1 = arith.constant 0 : index
    %c0_2 = arith.constant 0 : index
    %1 = vector.load %arg2[%c0_1, %c0_2] : memref<12x3xf32, #tpu.memory_space<vmem>>, vector<12x3xf32>
    %cst = arith.constant dense<0.000000e+00> : vector<12x128xf32>
    %2 = tpu.matmul %1, %0, %cst {dimension_numbers = #tpu.dot_dimension_numbers<[1], [0], [0], [1], [0, 0, 1, 1], [], []>} : vector<12x3xf32>, vector<3x128xf32>, vector<12x128xf32> -> vector<12x128xf32>
    %c0_3 = arith.constant 0 : index
    %c0_4 = arith.constant 0 : index
    %3 = vector.load %arg3[%c0_3, %c0_4] : memref<12x1xf32, #tpu.memory_space<vmem>>, vector<12x1xf32>
    %4 = vector.broadcast %3 : vector<12x1xf32> to vector<12x128xf32>
    %5 = arith.addf %2, %4 : vector<12x128xf32>
    %6 = math.tanh %5 : vector<12x128xf32>
    %c0_5 = arith.constant 0 : index
    %c0_6 = arith.constant 0 : index
    %7 = vector.load %arg4[%c0_5, %c0_6] : memref<9x12xf32, #tpu.memory_space<vmem>>, vector<9x12xf32>
    %cst_7 = arith.constant dense<0.000000e+00> : vector<9x128xf32>
    %8 = tpu.matmul %7, %6, %cst_7 {dimension_numbers = #tpu.dot_dimension_numbers<[1], [0], [0], [1], [0, 0, 1, 1], [], []>} : vector<9x12xf32>, vector<12x128xf32>, vector<9x128xf32> -> vector<9x128xf32>
    %c0_8 = arith.constant 0 : index
    %c0_9 = arith.constant 0 : index
    %9 = vector.load %arg5[%c0_8, %c0_9] : memref<9x1xf32, #tpu.memory_space<vmem>>, vector<9x1xf32>
    %10 = vector.broadcast %9 : vector<9x1xf32> to vector<9x128xf32>
    %11 = arith.addf %8, %10 : vector<9x128xf32>
    %12 = math.tanh %11 : vector<9x128xf32>
    %c0_10 = arith.constant 0 : index
    %c0_11 = arith.constant 0 : index
    %13 = vector.load %arg6[%c0_10, %c0_11] : memref<6x9xf32, #tpu.memory_space<vmem>>, vector<6x9xf32>
    %cst_12 = arith.constant dense<0.000000e+00> : vector<6x128xf32>
    %14 = tpu.matmul %13, %12, %cst_12 {dimension_numbers = #tpu.dot_dimension_numbers<[1], [0], [0], [1], [0, 0, 1, 1], [], []>} : vector<6x9xf32>, vector<9x128xf32>, vector<6x128xf32> -> vector<6x128xf32>
    %c0_13 = arith.constant 0 : index
    %c0_14 = arith.constant 0 : index
    %15 = vector.load %arg7[%c0_13, %c0_14] : memref<6x1xf32, #tpu.memory_space<vmem>>, vector<6x1xf32>
    %16 = vector.broadcast %15 : vector<6x1xf32> to vector<6x128xf32>
    %17 = arith.addf %14, %16 : vector<6x128xf32>
    %cst_15 = arith.constant 0.000000e+00 : f32
    %18 = vector.broadcast %cst_15 : f32 to vector<6x128xf32>
    %19 = arith.maximumf %17, %18 : vector<6x128xf32>
    %c0_16 = arith.constant 0 : index
    %c0_17 = arith.constant 0 : index
    %20 = vector.load %arg8[%c0_16, %c0_17] : memref<1x6xf32, #tpu.memory_space<vmem>>, vector<1x6xf32>
    %cst_18 = arith.constant dense<0.000000e+00> : vector<1x128xf32>
    %21 = tpu.matmul %20, %19, %cst_18 {dimension_numbers = #tpu.dot_dimension_numbers<[1], [0], [0], [1], [0, 0, 1, 1], [], []>} : vector<1x6xf32>, vector<6x128xf32>, vector<1x128xf32> -> vector<1x128xf32>
    %c0_19 = arith.constant 0 : index
    %c0_20 = arith.constant 0 : index
    %22 = vector.load %arg9[%c0_19, %c0_20] : memref<1x1xf32, #tpu.memory_space<vmem>>, vector<1x1xf32>
    %23 = vector.broadcast %22 : vector<1x1xf32> to vector<1x128xf32>
    %24 = arith.addf %21, %23 : vector<1x128xf32>
    %c0_21 = arith.constant 0 : index
    %c0_22 = arith.constant 0 : index
    %25 = vector.load %arg10[%c0_21, %c0_22] : memref<1x128xf32, #tpu.memory_space<vmem>>, vector<1x128xf32>
    tpu.vector_store %arg10[%c0_21, %c0_22], %24 {strides = array<i32>} : memref<1x128xf32, #tpu.memory_space<vmem>>, vector<1x128xf32>,
    return
  }
  func.func @transform_0(%arg0: i32) -> (i32, i32) {
    %c0_i32 = arith.constant 0 : i32
    %c0_i32_0 = arith.constant 0 : i32
    return %c0_i32, %arg0 : i32, i32
  }
  func.func @transform_1(%arg0: i32) -> (i32, i32) {
    %c0_i32 = arith.constant 0 : i32
    %c0_i32_0 = arith.constant 0 : i32
    %c0_i32_1 = arith.constant 0 : i32
    return %c0_i32, %c0_i32_0 : i32, i32
  }
  func.func @transform_2(%arg0: i32) -> (i32, i32) {
    %c0_i32 = arith.constant 0 : i32
    %c0_i32_0 = arith.constant 0 : i32
    %c0_i32_1 = arith.constant 0 : i32
    return %c0_i32, %c0_i32_0 : i32, i32
  }
  func.func @transform_3(%arg0: i32) -> (i32, i32) {
    %c0_i32 = arith.constant 0 : i32
    %c0_i32_0 = arith.constant 0 : i32
    %c0_i32_1 = arith.constant 0 : i32
    return %c0_i32, %c0_i32_0 : i32, i32
  }
  func.func @transform_4(%arg0: i32) -> (i32, i32) {
    %c0_i32 = arith.constant 0 : i32
    %c0_i32_0 = arith.constant 0 : i32
    %c0_i32_1 = arith.constant 0 : i32
    return %c0_i32, %c0_i32_0 : i32, i32
  }
  func.func @transform_5(%arg0: i32) -> (i32, i32) {
    %c0_i32 = arith.constant 0 : i32
    %c0_i32_0 = arith.constant 0 : i32
    %c0_i32_1 = arith.constant 0 : i32
    return %c0_i32, %c0_i32_0 : i32, i32
  }
  func.func @transform_6(%arg0: i32) -> (i32, i32) {
    %c0_i32 = arith.constant 0 : i32
    %c0_i32_0 = arith.constant 0 : i32
    %c0_i32_1 = arith.constant 0 : i32
    return %c0_i32, %c0_i32_0 : i32, i32
  }
  func.func @transform_7(%arg0: i32) -> (i32, i32) {
    %c0_i32 = arith.constant 0 : i32
    %c0_i32_0 = arith.constant 0 : i32
    %c0_i32_1 = arith.constant 0 : i32
    return %c0_i32, %c0_i32_0 : i32, i32
  }
  func.func @transform_8(%arg0: i32) -> (i32, i32) {
    %c0_i32 = arith.constant 0 : i32
    %c0_i32_0 = arith.constant 0 : i32
    %c0_i32_1 = arith.constant 0 : i32
    return %c0_i32, %c0_i32_0 : i32, i32
  }
  func.func @transform_9(%arg0: i32) -> (i32, i32) {
    %c0_i32 = arith.constant 0 : i32
    %c0_i32_0 = arith.constant 0 : i32
    return %c0_i32, %arg0 : i32, i32
  }
}

</mosaic_0001>

<llo_original>
// kernel: mlp_forward.2
$region0: #{mlp_forward.2}
  #allocation0 [shape = 'u32[]', space=smem, size = 0x4, offset = 0x4, fixed_abs, tag = 'smem constant byte address 0x4 - core index']
  #allocation1 [shape = 'u32[72,128]{1,0:T(1,128)}', space=vmem, size = 0x9000, scoped, tag = 'internal scratch']
  #allocation2 [shape = 'u32[2048]{0}', space=vmem, size = 0x2000, scoped, tag = 'scoped memory for mlp_forward.2']
  #allocation3 [shape = 'u32[2048]{0}', space=vmem, size = 0x2000, scoped, tag = 'scoped memory for mlp_forward.2']
  #allocation4 [shape = 'u32[2048]{0}', space=vmem, size = 0x2000, scoped, tag = 'scoped memory for mlp_forward.2']
  #allocation5 [shape = 'u32[2048]{0}', space=vmem, size = 0x2000, scoped, tag = 'scoped memory for mlp_forward.2']
  #allocation6 [shape = 'u32[2048]{0}', space=vmem, size = 0x2000, scoped, tag = 'scoped memory for mlp_forward.2']
  #allocation7 [shape = 'f32[1,1]{1,0:T(1,128)S(1)}', space=vmem, size = 0x200, scoped, tag = 'scoped memory for mlp_forward.2']
  %s0 = inlined_call_operand.vmem [shape: f32[12,3], index: 0, kind: input, shape index: {}]
  %s1 = inlined_call_operand.vmem [shape: f32[12,1], index: 1, kind: input, shape index: {}]
  %s2 = inlined_call_operand.vmem [shape: f32[9,12], index: 2, kind: input, shape index: {}]
  %s3 = inlined_call_operand.vmem [shape: f32[9,1], index: 3, kind: input, shape index: {}]
  %s4 = inlined_call_operand.vmem [shape: f32[6,9], index: 4, kind: input, shape index: {}]
  %s5 = inlined_call_operand.vmem [shape: f32[6,1], index: 5, kind: input, shape index: {}]
  %s6 = inlined_call_operand.vmem [shape: f32[1,6], index: 6, kind: input, shape index: {}]
  %s7 = inlined_call_operand.<no memory space> [shape: f32[1,1], index: 7, kind: input, shape index: {}]
  %s8 = inlined_call_operand.vmem [shape: f32[3,8], index: 8, kind: input, shape index: {}]
  %s9 = inlined_call_operand.<no memory space> [shape: f32[], index: 9, kind: input, shape index: {}]
  %s10 = inlined_call_operand.vmem [shape: f32[1,128], index: 10, kind: output, shape index: {}]
  %s11 = sld [smem:[#allocation0]]
  $region46: #{mlp_forward.2} parent=0
    _
  %s13 = ssub.s32 1, %s11
  %s14 = scalar_select 0, %s13, %s11
  %v15 = vstv %s9
  %v16 = vstv %s7
  %17 = vst [vmem:[#allocation7] sm:$0x1] %v16
  $region1: #{mlp_forward.2} parent=0
    #allocation8 [shape = 'u8[2048]{0}', space=vmem, size = 0x800, dematerialized = true, scoped, tag = 'FusionAdapter Buffer %fusion.1 = f32[3,128]{1,0:T(4,128)} fusion(%param_8.1, %param_9), kind=kLoop, calls=%fused_computation.2.clone, metadata={op_name="jit(mlp_forward)/scatter" stack_frame_id=7}']
    // Predicated region
    $region2: #{mlp_forward.2} parent=1 // pred_check
      _
    $region3: #{mlp_forward.2} parent=1 // pred_check_branch
      %19 = sbr.rel (0) target = $region5
    $region4: #{mlp_forward.2} parent=1 // pred_region
      _
    $region5: #{mlp_forward.2} parent=1 // pred_fallthru
      _
    // Predicated region
    $region6: #{mlp_forward.2} parent=1 // pred_check
      _
    $region7: #{mlp_forward.2} parent=1 // pred_check_branch
      %21 = sbr.rel (0) target = $region9
    $region8: #{mlp_forward.2} parent=1 // pred_region
      _
    $region9: #{mlp_forward.2} parent=1 // pred_fallthru
      _
    // Predicated region
    $region10: #{mlp_forward.2} parent=1 // pred_check
      _
    $region11: #{mlp_forward.2} parent=1 // pred_check_branch
      %23 = sbr.rel (0) target = $region13
    $region12: #{mlp_forward.2} parent=1 // pred_region
      _
    $region13: #{mlp_forward.2} parent=1 // pred_fallthru
      _
    // Predicated region
    $region14: #{mlp_forward.2} parent=1 // pred_check
      _
    $region15: #{mlp_forward.2} parent=1 // pred_check_branch
      %25 = sbr.rel (0) target = $region17
    $region16: #{mlp_forward.2} parent=1 // pred_region
      _
    $region17: #{mlp_forward.2} parent=1 // pred_fallthru
      _
    // Predicated region
    $region18: #{mlp_forward.2} parent=1 // pred_check
      _
    $region19: #{mlp_forward.2} parent=1 // pred_check_branch
      %27 = sbr.rel (0) target = $region21
    $region20: #{mlp_forward.2} parent=1 // pred_region
      _
    $region21: #{mlp_forward.2} parent=1 // pred_fallthru
      _
    // Predicated region
    $region22: #{mlp_forward.2} parent=1 // pred_check
      _
    $region23: #{mlp_forward.2} parent=1 // pred_check_branch
      %29 = sbr.rel (0) target = $region25
    $region24: #{mlp_forward.2} parent=1 // pred_region
      _
    $region25: #{mlp_forward.2} parent=1 // pred_fallthru
      _
    // Predicated region
    $region26: #{mlp_forward.2} parent=1 // pred_check
      _
    $region27: #{mlp_forward.2} parent=1 // pred_check_branch
      %31 = sbr.rel (0) target = $region29
    $region28: #{mlp_forward.2} parent=1 // pred_region
      _
    $region29: #{mlp_forward.2} parent=1 // pred_fallthru
      _
    // Predicated region
    $region30: #{mlp_forward.2} parent=1 // pred_check
      _
    $region31: #{mlp_forward.2} parent=1 // pred_check_branch
      %33 = sbr.rel (0) target = $region33
    $region32: #{mlp_forward.2} parent=1 // pred_region
      _
    $region33: #{mlp_forward.2} parent=1 // pred_fallthru
      _
    // Predicated region
    $region34: #{mlp_forward.2} parent=1 // pred_check
      _
    $region35: #{mlp_forward.2} parent=1 // pred_check_branch
      %35 = sbr.rel (0) target = $region37
    $region36: #{mlp_forward.2} parent=1 // pred_region
      _
    $region37: #{mlp_forward.2} parent=1 // pred_fallthru
      _
    %v36 = vld [vmem:[%s8] sm:$0x7]
    %v37 = vlaneseq
    %v38 = vshrl.u32 %v37, 7
    %vm40 = vcmp.lt.s32.totalorder %v38, 3
    %v41 = vsel %vm40, %v36, %v15
    %v42 = vlaneseq
    %v43 = vand.u32 %v42, 127
    %vm45 = vcmp.lt.s32.totalorder %v43, 8
    %v46 = vsel %vm45, %v41, %v15
    %s48 = ssub.s32 16, 1
    %49 = vst [vmem:[#allocation8] sm:%s48] %v46
    %v50 = vld [vmem:[#allocation8] sm:$0x7]
    %v51 = vld [vmem:[%s0] sm:$0xff]
    %v52 = vld [vmem:[%s0 + $0x8] sm:$0xf]
    %v53 = vld [vmem:[%s1] sm:$0xff]
    %v54 = vld [vmem:[%s1 + $0x8] sm:$0xf]
    %56 = vset.pattern.permute.xlu0 0
    %57 = vperm.xlu0 %56, %v53
    %v58 = vpop.permute.xlu0 %57
    %61 = vset.pattern.permute.xlu0 0
    %62 = vperm.xlu0 %61, %v54
    %v63 = vpop.permute.xlu0 %62
    %vm65 = vcmask 23552
    %v67 = vsel %vm65, %v51, 0
    %v70 = vsel %vm65, %v52, 0
    %vm72 = vcmask 1042432
    %v74 = vsel %vm72, %v50, 0
    %76 = vmatpush.msra.mxu0 0.0
    %77 = vmatpush.msra.mxu0 0.0
    %78 = vmatpush.msra.mxu0 0.0
    %79 = vmatpush.msra.mxu0 0.0
    %80 = vmatpush.msra.mxu0 0.0
    %81 = vmatpush.msra.mxu0 0.0
    %82 = vmatpush.msra.mxu0 0.0
    %83 = vmatpush.msra.mxu0 0.0
    %84 = vmatpush.msra.mxu0 0.0
    %85 = vmatpush.msra.mxu0 0.0
    %86 = vmatpush.msra.mxu0 0.0
    %87 = vmatpush.msra.mxu0 0.0
    %88 = vmatpush.msra.mxu0 0.0
    %89 = vmatpush.msra.mxu0 0.0
    %90 = vmatpush.msra.mxu0 0.0
    %91 = vmatpush.msra.mxu0 %v74
    %92 = vmatmul.f32.gmra.mxu0 %v67
    %v93 = vpop.f32.mrf.mxu0
    %v94 = vadd.f32 %v58, %v93
    %95 = vmatmul.f32.gmra.mxu0 %v70
    %v96 = vpop.f32.mrf.mxu0
    %v97 = vadd.f32 %v63, %v96
    %98 = vdwg.mxu0
    %v99 = vtanh.pop %v94
    %v100 = vtanh.pop %v97
    %v101 = vld [vmem:[%s2] sm:$0xff]
    %v102 = vld [vmem:[%s2 + $0x8] sm:$0x1]
    %v103 = vld [vmem:[%s3] sm:$0xff]
    %v104 = vld [vmem:[%s3 + $0x8] sm:$0x1]
    %106 = vset.pattern.permute.xlu0 0
    %107 = vperm.xlu0 %106, %v103
    %v108 = vpop.permute.xlu0 %107
    %111 = vset.pattern.permute.xlu0 0
    %112 = vperm.xlu0 %111, %v104
    %v113 = vpop.permute.xlu0 %112
    %vm115 = vcmask 97280
    %v117 = vsel %vm115, %v101, 0
    %v120 = vsel %vm115, %v102, 0
    %vm122 = vcmask 1043456
    %v124 = vsel %vm122, %v100, 0
    %126 = vmatpush.msra.mxu0 0.0
    %127 = vmatpush.msra.mxu0 0.0
    %128 = vmatpush.msra.mxu0 0.0
    %129 = vmatpush.msra.mxu0 0.0
    %130 = vmatpush.msra.mxu0 0.0
    %131 = vmatpush.msra.mxu0 0.0
    %132 = vmatpush.msra.mxu0 0.0
    %133 = vmatpush.msra.mxu0 0.0
    %134 = vmatpush.msra.mxu0 0.0
    %135 = vmatpush.msra.mxu0 0.0
    %136 = vmatpush.msra.mxu0 0.0
    %137 = vmatpush.msra.mxu0 0.0
    %138 = vmatpush.msra.mxu0 0.0
    %139 = vmatpush.msra.mxu0 0.0
    %140 = vmatpush.msra.mxu0 %v124
    %141 = vmatpush.msra.mxu0 %v99
    %142 = vmatmul.f32.gmra.mxu0 %v117
    %v143 = vpop.f32.mrf.mxu0
    %v144 = vadd.f32 %v108, %v143
    %145 = vmatmul.f32.gmra.mxu0 %v120
    %v146 = vpop.f32.mrf.mxu0
    %v147 = vadd.f32 %v113, %v146
    %148 = vdwg.mxu0
    %v149 = vtanh.pop %v144
    %v150 = vtanh.pop %v147
    %v151 = vld [vmem:[%s4] sm:$0x3f]
    %v152 = vld [vmem:[%s5] sm:$0x3f]
    %154 = vset.pattern.permute.xlu0 0
    %155 = vperm.xlu0 %154, %v152
    %v156 = vpop.permute.xlu0 %155
    %vm158 = vcmask 72704
    %v160 = vsel %vm158, %v151, 0
    %vm162 = vcmask 1040384
    %v164 = vsel %vm162, %v150, 0
    %166 = vmatpush.msra.mxu0 0.0
    %167 = vmatpush.msra.mxu0 0.0
    %168 = vmatpush.msra.mxu0 0.0
    %169 = vmatpush.msra.mxu0 0.0
    %170 = vmatpush.msra.mxu0 0.0
    %171 = vmatpush.msra.mxu0 0.0
    %172 = vmatpush.msra.mxu0 0.0
    %173 = vmatpush.msra.mxu0 0.0
    %174 = vmatpush.msra.mxu0 0.0
    %175 = vmatpush.msra.mxu0 0.0
    %176 = vmatpush.msra.mxu0 0.0
    %177 = vmatpush.msra.mxu0 0.0
    %178 = vmatpush.msra.mxu0 0.0
    %179 = vmatpush.msra.mxu0 0.0
    %180 = vmatpush.msra.mxu0 %v164
    %181 = vmatpush.msra.mxu0 %v149
    %182 = vmatmul.f32.gmra.mxu0 %v160
    %v183 = vpop.f32.mrf.mxu0
    %v184 = vadd.f32 %v156, %v183
    %185 = vdwg.mxu0
    %v186 = vmax.f32 %v184, 0.0
    %v187 = vld [vmem:[%s6] sm:$0x1]
    %v188 = vld [vmem:[#allocation7] sm:$0x1]
    %190 = vset.pattern.permute.xlu0 0
    %191 = vperm.xlu0 %190, %v188
    %v192 = vpop.permute.xlu0 %191
    %v194 = vperm.slane %v192, 0
    %vm195 = vcmask 48128
    %v197 = vsel %vm195, %v187, 0
    %vm199 = vcmask 1045504
    %v201 = vsel %vm199, %v186, 0
    %203 = vmatpush.msra.mxu0 0.0
    %204 = vmatpush.msra.mxu0 0.0
    %205 = vmatpush.msra.mxu0 0.0
    %206 = vmatpush.msra.mxu0 0.0
    %207 = vmatpush.msra.mxu0 0.0
    %208 = vmatpush.msra.mxu0 0.0
    %209 = vmatpush.msra.mxu0 0.0
    %210 = vmatpush.msra.mxu0 0.0
    %211 = vmatpush.msra.mxu0 0.0
    %212 = vmatpush.msra.mxu0 0.0
    %213 = vmatpush.msra.mxu0 0.0
    %214 = vmatpush.msra.mxu0 0.0
    %215 = vmatpush.msra.mxu0 0.0
    %216 = vmatpush.msra.mxu0 0.0
    %217 = vmatpush.msra.mxu0 0.0
    %218 = vmatpush.msra.mxu0 %v201
    %219 = vmatmul.f32.gmra.mxu0 %v197
    %v220 = vpop.f32.mrf.mxu0
    %v221 = vadd.f32 %v194, %v220
    %222 = vdwg.mxu0
    %223 = vst [vmem:[%s10] sm:$0x1] %v221
    // Predicated region
    $region38: #{mlp_forward.2} parent=1 // pred_check
      _
    $region39: #{mlp_forward.2} parent=1 // pred_check_branch
      %225 = sbr.rel (0) target = $region41
    $region40: #{mlp_forward.2} parent=1 // pred_region
      _
    $region41: #{mlp_forward.2} parent=1 // pred_fallthru
      _
    // Predicated region
    $region42: #{mlp_forward.2} parent=1 // pred_check
      _
    $region43: #{mlp_forward.2} parent=1 // pred_check_branch
      %227 = sbr.rel (0) target = $region45
    $region44: #{mlp_forward.2} parent=1 // pred_region
      _
    $region45: #{mlp_forward.2} parent=1 // pred_fallthru
      _

</llo_original>
